<compile_context>
chip_gen: v6e
topology: v6e:2x2x1
jax: 0.10.0
libtpu: 0.0.40
codegen_flags: <defaults>
</compile_context>

<pallas_src>
import functools
import math

import jax
import jax.numpy as jnp
import numpy as np
from jax import lax
from jax.experimental import pallas as pl
from jax.experimental.pallas import tpu as pltpu

LANES = 128
EPS = 1e-20


def _round_up(a, b):
    return -(-a // b) * b


# ---------------------------------------------------------------------------
# Shared per-element math.  Every stage calls these SAME helpers so the
# recomputed u_d / u_d_2 values are bit-identical across pallas_calls and the
# `== global_min` zero-fill stays exact.
# ---------------------------------------------------------------------------
def _t1(x, sita, t_d, k, sim_len):
    t = jnp.maximum(
        jnp.ceil((-jnp.log(jnp.maximum(x / sita, 0.0) + EPS) + t_d) / k), 0.0)
    return jnp.where(t > sim_len, sim_len + 5.0, t)


def _ud(t, sita, t_d, k):
    return jnp.exp(-k * t + t_d) * sita


def _t2(x, u_d_z, t, sita2, t_d2, k2, sim_len):
    t2 = jnp.maximum(
        jnp.ceil((-jnp.log(jnp.maximum((x - u_d_z) / sita2, 0.0) + EPS) + t_d2)
                 / k2), 0.0)
    t2 = jnp.where(t2 > sim_len, sim_len, t2)
    return jnp.where(t2 <= t, t, t2)


def _unpack(params_ref):
    return (params_ref[0], params_ref[1], params_ref[2],
            params_ref[3], params_ref[4], params_ref[5], params_ref[6])


def _valid_mask(shape, start, n_valid):
    rows = lax.broadcasted_iota(jnp.int32, shape, 0)
    cols = lax.broadcasted_iota(jnp.int32, shape, 1)
    return start + rows * LANES + cols < n_valid


def _block_min(vals, n_valid, block_elems):
    """Min over this block; padding / out-of-range rows (last block only) excluded."""
    if n_valid % block_elems == 0:          # static: every block fully valid
        return jnp.min(vals)
    i = pl.program_id(0)
    is_last = i == pl.num_programs(0) - 1
    keep = jnp.logical_or(jnp.logical_not(is_last),
                          _valid_mask(vals.shape, i * block_elems, n_valid))
    return jnp.min(jnp.where(keep, vals, jnp.inf))


# ---------------- fused single-kernel path (small / medium tensors) ---------
def _fused_kernel(params_ref, x_ref, out_ref, *, n_valid):
    sita, t_d, k, sita2, t_d2, k2, sim_len = _unpack(params_ref)
    x = x_ref[...]
    total = x.shape[0] * x.shape[1]
    mask = None if n_valid == total else _valid_mask(x.shape, 0, n_valid)

    def gmin(v):
        return jnp.min(v) if mask is None else jnp.min(jnp.where(mask, v, jnp.inf))

    t = _t1(x, sita, t_d, k, sim_len)
    u_d = _ud(t, sita, t_d, k)
    u_d = jnp.where(u_d == gmin(u_d), 0.0, u_d)
    t2 = _t2(x, u_d, t, sita2, t_d2, k2, sim_len)
    u_d_2 = _ud(t2, sita2, t_d2, k2)
    u_d_2 = jnp.where(u_d_2 == gmin(u_d_2), 0.0, u_d_2)
    out_ref[...] = u_d + u_d_2


# ---------------- tiled 3-stage path (large tensors) ------------------------
def _stage1_kernel(params_ref, x_ref, min_ref, *, n_valid, block_elems):
    # partial min of u_d only; u_d is NOT written back to HBM (recomputed later)
    sita, t_d, k, _, _, _, sim_len = _unpack(params_ref)
    u_d = _ud(_t1(x_ref[...], sita, t_d, k, sim_len), sita, t_d, k)
    m = _block_min(u_d, n_valid, block_elems)
    min_ref[...] = jnp.full(min_ref.shape, m, jnp.float32)


def _stage2_min_kernel(params_ref, min1_ref, x_ref, min_ref, *,
                       n_valid, block_elems):
    # 16 B/elem variant: recompute t/u_d, emit only the partial min of u_d_2
    sita, t_d, k, sita2, t_d2, k2, sim_len = _unpack(params_ref)
    x = x_ref[...]
    t = _t1(x, sita, t_d, k, sim_len)
    u_d = _ud(t, sita, t_d, k)
    u_d_z = jnp.where(u_d == min1_ref[0], 0.0, u_d)
    u_d_2 = _ud(_t2(x, u_d_z, t, sita2, t_d2, k2, sim_len), sita2, t_d2, k2)
    m = _block_min(u_d_2, n_valid, block_elems)
    min_ref[...] = jnp.full(min_ref.shape, m, jnp.float32)


def _stage2_emit_kernel(params_ref, min1_ref, x_ref, ud2_ref, min_ref, *,
                        n_valid, block_elems):
    # 24 B/elem variant (v7x): also materialize u_d_2 for stage 3
    sita, t_d, k, sita2, t_d2, k2, sim_len = _unpack(params_ref)
    x = x_ref[...]
    t = _t1(x, sita, t_d, k, sim_len)
    u_d = _ud(t, sita, t_d, k)
    u_d_z = jnp.where(u_d == min1_ref[0], 0.0, u_d)
    u_d_2 = _ud(_t2(x, u_d_z, t, sita2, t_d2, k2, sim_len), sita2, t_d2, k2)
    ud2_ref[...] = u_d_2
    m = _block_min(u_d_2, n_valid, block_elems)
    min_ref[...] = jnp.full(min_ref.shape, m, jnp.float32)


def _stage3_recompute_kernel(params_ref, min1_ref, min2_ref, x_ref, out_ref):
    # 16 B/elem variant: full recompute, both zero-fills, final sum
    sita, t_d, k, sita2, t_d2, k2, sim_len = _unpack(params_ref)
    x = x_ref[...]
    t = _t1(x, sita, t_d, k, sim_len)
    u_d = _ud(t, sita, t_d, k)
    u_d_z = jnp.where(u_d == min1_ref[0], 0.0, u_d)
    u_d_2 = _ud(_t2(x, u_d_z, t, sita2, t_d2, k2, sim_len), sita2, t_d2, k2)
    u_d_2 = jnp.where(u_d_2 == min2_ref[0], 0.0, u_d_2)
    out_ref[...] = u_d_z + u_d_2


def _stage3_readud2_kernel(params_ref, min1_ref, min2_ref, x_ref, ud2_ref,
                           out_ref):
    # 24 B/elem variant: recompute u_d only, read u_d_2 from HBM
    sita, t_d, k, _, _, _, sim_len = _unpack(params_ref)
    u_d = _ud(_t1(x_ref[...], sita, t_d, k, sim_len), sita, t_d, k)
    u_d_z = jnp.where(u_d == min1_ref[0], 0.0, u_d)
    u_d_2 = ud2_ref[...]
    u_d_2 = jnp.where(u_d_2 == min2_ref[0], 0.0, u_d_2)
    out_ref[...] = u_d_z + u_d_2


# ---------------------------------------------------------------------------
@functools.lru_cache(maxsize=1)
def _device_defaults():
    kind = ""
    try:
        kind = jax.devices()[0].device_kind.lower()
    except Exception:
        pass
    older = any(s in kind for s in ("v2", "v3", "v4", "v5", "v6"))
    if older:
        # v5e/v6e: HBM-starved, 128 MiB VMEM -> 16 B/elem full recompute,
        # bigger fused-in-VMEM threshold.
        return dict(fused_max_elems=1 << 20,
                    vmem_limit_bytes=64 * 1024 * 1024,
                    keep_ud2=False)
    # v7x (or unknown): 3.2 TB/s HBM but single EUP slot and only 64 MiB VMEM
    # -> keep u_d_2 materialized (24 B/elem) and cap VMEM / fused threshold.
    return dict(fused_max_elems=1 << 19,
                vmem_limit_bytes=48 * 1024 * 1024,
                keep_ud2=True)


def en_decoding2_forward(x, params, *, block_rows=4096, fused_max_elems=None,
                         vmem_limit_bytes=None, keep_ud2=None):
    """params: f32[7] = [sita, t_d, k, sita_2, t_d_2, k_2, sim_length]."""
    defaults = _device_defaults()
    if fused_max_elems is None:
        fused_max_elems = defaults["fused_max_elems"]
    if vmem_limit_bytes is None:
        vmem_limit_bytes = defaults["vmem_limit_bytes"]
    if keep_ud2 is None:
        keep_ud2 = defaults["keep_ud2"]

    orig_shape = x.shape
    x = x.astype(jnp.float32)
    params = params.astype(jnp.float32)
    n_valid = int(math.prod(orig_shape))
    if n_valid == 0:
        return jnp.zeros(orig_shape, jnp.float32)

    smem = pl.BlockSpec(memory_space=pltpu.SMEM)

    # ----- fused path: whole slab in VMEM, one dispatch, 8 B/elem -----
    if n_valid <= fused_max_elems:
        rows = -(-n_valid // LANES)
        total = rows * LANES
        flat = x.reshape(-1)
        if total != n_valid:                       # lane-ragged only
            flat = jnp.pad(flat, (0, total - n_valid))
        xf = flat.reshape(rows, LANES)
        slab_spec = pl.BlockSpec((rows, LANES), lambda i: (0, 0))
        out = pl.pallas_call(
            functools.partial(_fused_kernel, n_valid=n_valid),
            grid=(1,),
            in_specs=[smem, slab_spec],
            out_specs=slab_spec,
            out_shape=jax.ShapeDtypeStruct((rows, LANES), jnp.float32),
            compiler_params=pltpu.CompilerParams(
                dimension_semantics=("arbitrary",),
                vmem_limit_bytes=vmem_limit_bytes),
        )(params, xf)
        if total != n_valid:
            return out.reshape(-1)[:n_valid].reshape(orig_shape)
        return out.reshape(orig_shape)

    # ----- tiled multi-pass path -----
    rows_valid = -(-n_valid // LANES)
    rows8 = _round_up(rows_valid, 8)               # sublane-tile aligned rows
    total8 = rows8 * LANES
    flat = x.reshape(-1)
    padded = total8 != n_valid
    if padded:                                     # ragged element count only
        flat = jnp.pad(flat, (0, total8 - n_valid))
    xf = flat.reshape(rows8, LANES)

    br = max(8, min(_round_up(block_rows, 8), rows8))
    nblk = -(-rows8 // br)                         # cdiv grid; last block masked
    block_elems = br * LANES

    blk = pl.BlockSpec((br, LANES), lambda i: (i, 0))
    pmin_spec = pl.BlockSpec((1, 8, 128), lambda i: (i, 0, 0))
    slab = jax.ShapeDtypeStruct((rows8, LANES), jnp.float32)
    pmin_shape = jax.ShapeDtypeStruct((nblk, 8, 128), jnp.float32)
    cparams = pltpu.CompilerParams(dimension_semantics=("parallel",),
                                   vmem_limit_bytes=vmem_limit_bytes)

    # stage 1: per-block partial min of u_d (u_d never hits HBM)
    pmin1 = pl.pallas_call(
        functools.partial(_stage1_kernel, n_valid=n_valid,
                          block_elems=block_elems),
        grid=(nblk,), in_specs=[smem, blk],
        out_specs=pmin_spec, out_shape=pmin_shape,
        compiler_params=cparams,
    )(params, xf)
    min1 = jnp.min(pmin1).reshape(1)

    if keep_ud2:
        # 24 B/elem (v7x): keep u_d_2 materialized so HBM stays the binding unit
        u_d_2, pmin2 = pl.pallas_call(
            functools.partial(_stage2_emit_kernel, n_valid=n_valid,
                              block_elems=block_elems),
            grid=(nblk,), in_specs=[smem, smem, blk],
            out_specs=(blk, pmin_spec), out_shape=(slab, pmin_shape),
            compiler_params=cparams,
        )(params, min1, xf)
        min2 = jnp.min(pmin2).reshape(1)
        out = pl.pallas_call(
            _stage3_readud2_kernel,
            grid=(nblk,), in_specs=[smem, smem, smem, blk, blk],
            out_specs=blk, out_shape=slab,
            compiler_params=cparams,
            input_output_aliases={4: 0},           # overwrite u_d_2 in place
        )(params, min1, min2, xf, u_d_2)
    else:
        # 16 B/elem floor (v5e/v6e): stages 1-2 emit only partial mins
        pmin2 = pl.pallas_call(
            functools.partial(_stage2_min_kernel, n_valid=n_valid,
                              block_elems=block_elems),
            grid=(nblk,), in_specs=[smem, smem, blk],
            out_specs=pmin_spec, out_shape=pmin_shape,
            compiler_params=cparams,
        )(params, min1, xf)
        min2 = jnp.min(pmin2).reshape(1)
        out = pl.pallas_call(
            _stage3_recompute_kernel,
            grid=(nblk,), in_specs=[smem, smem, smem, blk],
            out_specs=blk, out_shape=slab,
            compiler_params=cparams,
        )(params, min1, min2, xf)

    if padded:
        return out.reshape(-1)[:n_valid].reshape(orig_shape)
    return out.reshape(orig_shape)


# ---------------- pure-JAX reference (mirrors the PyTorch forward) ----------
def _reference(x, params):
    sita, t_d, k, sita2, t_d2, k2, sim_len = [params[j] for j in range(7)]
    x = x.astype(jnp.float32)
    t = jnp.maximum(jnp.ceil((-jnp.log(jnp.maximum(x / sita, 0.0) + EPS) + t_d) / k), 0.0)
    t = jnp.where(t > sim_len, sim_len + 5.0, t)
    u_d = jnp.exp(-k * t + t_d) * sita
    u_d = jnp.where(u_d == u_d.min(), 0.0, u_d)
    t2 = jnp.maximum(jnp.ceil((-jnp.log(jnp.maximum((x - u_d) / sita2, 0.0) + EPS) + t_d2) / k2), 0.0)
    t2 = jnp.where(t2 > sim_len, sim_len, t2)
    t2 = jnp.where(t2 <= t, t, t2)
    u_d_2 = jnp.exp(-k2 * t2 + t_d2) * sita2
    u_d_2 = jnp.where(u_d_2 == u_d_2.min(), 0.0, u_d_2)
    return u_d + u_d_2


if __name__ == "__main__":
    # deterministic parameter init (matches the module's __init__ values)
    sim_length = 8
    params = jnp.array([2.0, -0.9, 0.9, 1.0, -0.8, 1.0, float(sim_length)],
                       dtype=jnp.float32)

    key = jax.random.PRNGKey(0)
    k1, k2, k3, k4, k5 = jax.random.split(key, 5)

    def check(out, x):
        np.testing.assert_allclose(np.asarray(out),
                                   np.asarray(_reference(x, params)),
                                   rtol=1e-5, atol=1e-6)

    # 1) primary NCHW example -> fused single-kernel path (device defaults)
    x_small = jax.random.normal(k1, (2, 4, 16, 16), dtype=jnp.float32)
    fwd_default = jax.jit(lambda a, p: en_decoding2_forward(a, p))
    check(jax.block_until_ready(fwd_default(x_small, params)), x_small)

    # 2) ragged element count (pad + masked last block), both tiled variants
    x_odd = jax.random.normal(k2, (3, 5, 9, 13), dtype=jnp.float32)   # 1755 elems
    fwd_fr_small = jax.jit(lambda a, p: en_decoding2_forward(
        a, p, block_rows=8, fused_max_elems=0, keep_ud2=False))
    fwd_ud2_small = jax.jit(lambda a, p: en_decoding2_forward(
        a, p, block_rows=8, fused_max_elems=0, keep_ud2=True))
    check(jax.block_until_ready(fwd_fr_small(x_odd, params)), x_odd)
    check(jax.block_until_ready(fwd_ud2_small(x_odd, params)), x_odd)

    # 3) pad-free slab with a ragged grid (rows % block_rows != 0), both variants
    x_rg = jax.random.normal(k3, (2, 3, 16, 32), dtype=jnp.float32)   # 3072 elems
    fwd_fr_rg = jax.jit(lambda a, p: en_decoding2_forward(
        a, p, block_rows=16, fused_max_elems=0, keep_ud2=False))
    fwd_ud2_rg = jax.jit(lambda a, p: en_decoding2_forward(
        a, p, block_rows=16, fused_max_elems=0, keep_ud2=True))
    check(jax.block_until_ready(fwd_fr_rg(x_rg, params)), x_rg)
    check(jax.block_until_ready(fwd_ud2_rg(x_rg, params)), x_rg)

    # 4) larger tensor through the default large-block tiled path (2 x 2 MiB blocks)
    x_med = jax.random.normal(k4, (8, 8, 128, 128), dtype=jnp.float32)
    fwd_tiled_big = jax.jit(lambda a, p: en_decoding2_forward(
        a, p, fused_max_elems=0))
    check(jax.block_until_ready(fwd_tiled_big(x_med, params)), x_med)

    # 5) medium tensor through the raised-threshold fused-in-VMEM path
    x_fused = jax.random.normal(k5, (4, 8, 64, 128), dtype=jnp.float32)  # 262144 elems
    fwd_fused_med = jax.jit(lambda a, p: en_decoding2_forward(
        a, p, fused_max_elems=1 << 19))
    check(jax.block_until_ready(fwd_fused_med(x_fused, params)), x_fused)

    print("KERNEL_OK")
</pallas_src>

<mosaic_0001>
module attributes {stable_mosaic.version = 11 : i64} {
  func.func @_fused_kernel(%arg0: i32, %arg1: memref<7xf32, #tpu.memory_space<smem>>, %arg2: memref<16x128xf32, #tpu.memory_space<vmem>>, %arg3: memref<16x128xf32, #tpu.memory_space<vmem>>) attributes {dimension_semantics = [#tpu.dimension_semantics<arbitrary>], iteration_bounds = array<i64: 1>, scalar_prefetch = 0 : i64, scratch_operands = 0 : i64, tpu.core_type = #tpu.core_type<tc>, window_params = [{transform_indices = @transform_0, window_bounds = array<i64: 7>}, {pipeline_mode = #tpu.pipeline_mode<synchronous>, transform_indices = @transform_1, window_bounds = array<i64: 16, 128>}, {pipeline_mode = #tpu.pipeline_mode<synchronous>, transform_indices = @transform_2, window_bounds = array<i64: 16, 128>}]} {
    %c0 = arith.constant 0 : index
    %0 = memref.load %arg1[%c0] : memref<7xf32, #tpu.memory_space<smem>>
    %c1 = arith.constant 1 : index
    %1 = memref.load %arg1[%c1] : memref<7xf32, #tpu.memory_space<smem>>
    %c2 = arith.constant 2 : index
    %2 = memref.load %arg1[%c2] : memref<7xf32, #tpu.memory_space<smem>>
    %c3 = arith.constant 3 : index
    %3 = memref.load %arg1[%c3] : memref<7xf32, #tpu.memory_space<smem>>
    %c4 = arith.constant 4 : index
    %4 = memref.load %arg1[%c4] : memref<7xf32, #tpu.memory_space<smem>>
    %c5 = arith.constant 5 : index
    %5 = memref.load %arg1[%c5] : memref<7xf32, #tpu.memory_space<smem>>
    %c6 = arith.constant 6 : index
    %6 = memref.load %arg1[%c6] : memref<7xf32, #tpu.memory_space<smem>>
    %c0_0 = arith.constant 0 : index
    %c0_1 = arith.constant 0 : index
    %7 = vector.load %arg2[%c0_0, %c0_1] : memref<16x128xf32, #tpu.memory_space<vmem>>, vector<16x128xf32>
    %8 = vector.broadcast %0 : f32 to vector<16x128xf32>
    %9 = arith.divf %7, %8 : vector<16x128xf32>
    %cst = arith.constant 0.000000e+00 : f32
    %10 = vector.broadcast %cst : f32 to vector<16x128xf32>
    %11 = arith.maximumf %9, %10 : vector<16x128xf32>
    %cst_2 = arith.constant 9.99999968E-21 : f32
    %12 = vector.broadcast %cst_2 : f32 to vector<16x128xf32>
    %13 = arith.addf %11, %12 : vector<16x128xf32>
    %14 = math.log %13 : vector<16x128xf32>
    %cst_3 = arith.constant 0.000000e+00 : f32
    %15 = vector.broadcast %cst_3 : f32 to vector<16x128xf32>
    %16 = arith.subf %15, %14 : vector<16x128xf32>
    %17 = vector.broadcast %1 : f32 to vector<16x128xf32>
    %18 = arith.addf %16, %17 : vector<16x128xf32>
    %19 = vector.broadcast %2 : f32 to vector<16x128xf32>
    %20 = arith.divf %18, %19 : vector<16x128xf32>
    %21 = math.ceil %20 : vector<16x128xf32>
    %cst_4 = arith.constant 0.000000e+00 : f32
    %22 = vector.broadcast %cst_4 : f32 to vector<16x128xf32>
    %23 = arith.maximumf %21, %22 : vector<16x128xf32>
    %24 = vector.broadcast %6 : f32 to vector<16x128xf32>
    %25 = arith.cmpf ogt, %23, %24 : vector<16x128xf32>
    %cst_5 = arith.constant 5.000000e+00 : f32
    %26 = arith.addf %6, %cst_5 : f32
    %27 = vector.broadcast %26 : f32 to vector<16x128xf32>
    %28 = arith.select %25, %27, %23 : vector<16x128xi1>, vector<16x128xf32>
    %cst_6 = arith.constant 0.000000e+00 : f32
    %29 = arith.subf %cst_6, %2 : f32
    %30 = vector.broadcast %29 : f32 to vector<16x128xf32>
    %31 = arith.mulf %30, %28 : vector<16x128xf32>
    %32 = vector.broadcast %1 : f32 to vector<16x128xf32>
    %33 = arith.addf %31, %32 : vector<16x128xf32>
    %34 = math.exp %33 : vector<16x128xf32>
    %35 = vector.broadcast %0 : f32 to vector<16x128xf32>
    %36 = arith.mulf %34, %35 : vector<16x128xf32>
    %37 = vector.shape_cast %36 : vector<16x128xf32> to vector<1x16x128xf32>
    %cst_7 = arith.constant dense<0x7F800000> : vector<1xf32>
    %38 = vector.multi_reduction <minimumf>, %37, %cst_7 [1, 2] : vector<1x16x128xf32> to vector<1xf32>
    %39 = vector.shape_cast %38 : vector<1xf32> to vector<1x1x1xf32>
    %40 = vector.extract %39[0, 0, 0] : f32 from vector<1x1x1xf32>
    %41 = vector.broadcast %40 : f32 to vector<16x128xf32>
    %42 = arith.cmpf oeq, %36, %41 : vector<16x128xf32>
    %cst_8 = arith.constant 0.000000e+00 : f32
    %43 = vector.broadcast %cst_8 : f32 to vector<16x128xf32>
    %44 = arith.select %42, %43, %36 : vector<16x128xi1>, vector<16x128xf32>
    %45 = arith.subf %7, %44 : vector<16x128xf32>
    %46 = vector.broadcast %3 : f32 to vector<16x128xf32>
    %47 = arith.divf %45, %46 : vector<16x128xf32>
    %cst_9 = arith.constant 0.000000e+00 : f32
    %48 = vector.broadcast %cst_9 : f32 to vector<16x128xf32>
    %49 = arith.maximumf %47, %48 : vector<16x128xf32>
    %cst_10 = arith.constant 9.99999968E-21 : f32
    %50 = vector.broadcast %cst_10 : f32 to vector<16x128xf32>
    %51 = arith.addf %49, %50 : vector<16x128xf32>
    %52 = math.log %51 : vector<16x128xf32>
    %cst_11 = arith.constant 0.000000e+00 : f32
    %53 = vector.broadcast %cst_11 : f32 to vector<16x128xf32>
    %54 = arith.subf %53, %52 : vector<16x128xf32>
    %55 = vector.broadcast %4 : f32 to vector<16x128xf32>
    %56 = arith.addf %54, %55 : vector<16x128xf32>
    %57 = vector.broadcast %5 : f32 to vector<16x128xf32>
    %58 = arith.divf %56, %57 : vector<16x128xf32>
    %59 = math.ceil %58 : vector<16x128xf32>
    %cst_12 = arith.constant 0.000000e+00 : f32
    %60 = vector.broadcast %cst_12 : f32 to vector<16x128xf32>
    %61 = arith.maximumf %59, %60 : vector<16x128xf32>
    %62 = vector.broadcast %6 : f32 to vector<16x128xf32>
    %63 = arith.cmpf ogt, %61, %62 : vector<16x128xf32>
    %64 = vector.broadcast %6 : f32 to vector<16x128xf32>
    %65 = arith.select %63, %64, %61 : vector<16x128xi1>, vector<16x128xf32>
    %66 = arith.cmpf ole, %65, %28 : vector<16x128xf32>
    %67 = arith.select %66, %28, %65 : vector<16x128xi1>, vector<16x128xf32>
    %cst_13 = arith.constant 0.000000e+00 : f32
    %68 = arith.subf %cst_13, %5 : f32
    %69 = vector.broadcast %68 : f32 to vector<16x128xf32>
    %70 = arith.mulf %69, %67 : vector<16x128xf32>
    %71 = vector.broadcast %4 : f32 to vector<16x128xf32>
    %72 = arith.addf %70, %71 : vector<16x128xf32>
    %73 = math.exp %72 : vector<16x128xf32>
    %74 = vector.broadcast %3 : f32 to vector<16x128xf32>
    %75 = arith.mulf %73, %74 : vector<16x128xf32>
    %76 = vector.shape_cast %75 : vector<16x128xf32> to vector<1x16x128xf32>
    %cst_14 = arith.constant dense<0x7F800000> : vector<1xf32>
    %77 = vector.multi_reduction <minimumf>, %76, %cst_14 [1, 2] : vector<1x16x128xf32> to vector<1xf32>
    %78 = vector.shape_cast %77 : vector<1xf32> to vector<1x1x1xf32>
    %79 = vector.extract %78[0, 0, 0] : f32 from vector<1x1x1xf32>
    %80 = vector.broadcast %79 : f32 to vector<16x128xf32>
    %81 = arith.cmpf oeq, %75, %80 : vector<16x128xf32>
    %cst_15 = arith.constant 0.000000e+00 : f32
    %82 = vector.broadcast %cst_15 : f32 to vector<16x128xf32>
    %83 = arith.select %81, %82, %75 : vector<16x128xi1>, vector<16x128xf32>
    %84 = arith.addf %44, %83 : vector<16x128xf32>
    %c0_16 = arith.constant 0 : index
    %c0_17 = arith.constant 0 : index
    %85 = vector.load %arg3[%c0_16, %c0_17] : memref<16x128xf32, #tpu.memory_space<vmem>>, vector<16x128xf32>
    tpu.vector_store %arg3[%c0_16, %c0_17], %84 {strides = array<i32>} : memref<16x128xf32, #tpu.memory_space<vmem>>, vector<16x128xf32>,
    return
  }
  func.func @transform_0(%arg0: i32) -> i32 {
    %c0_i32 = arith.constant 0 : i32
    %c0_i32_0 = arith.constant 0 : i32
    return %c0_i32 : i32
  }
  func.func @transform_1(%arg0: i32) -> (i32, i32) {
    %c0_i32 = arith.constant 0 : i32
    %c0_i32_0 = arith.constant 0 : i32
    %c0_i32_1 = arith.constant 0 : i32
    return %c0_i32, %c0_i32_0 : i32, i32
  }
  func.func @transform_2(%arg0: i32) -> (i32, i32) {
    %c0_i32 = arith.constant 0 : i32
    %c0_i32_0 = arith.constant 0 : i32
    %c0_i32_1 = arith.constant 0 : i32
    return %c0_i32, %c0_i32_0 : i32, i32
  }
}

</mosaic_0001>

<llo_original>
// kernel: _lambda_.1
$region0: #{_lambda_.1}
  #allocation0 [shape = 'u32[]', space=smem, size = 0x4, offset = 0x4, fixed_abs, tag = 'smem constant byte address 0x4 - core index']
  #allocation1 [shape = 'u32[144,128]{1,0:T(1,128)}', space=vmem, size = 0x12000, scoped, tag = 'internal scratch']
  %s0 = inlined_call_operand.vmem [shape: f32[7], index: 0, kind: input, shape index: {}]
  %s1 = inlined_call_operand.vmem [shape: f32[16,128], index: 1, kind: input, shape index: {}]
  %s2 = inlined_call_operand.vmem [shape: f32[16,128], index: 2, kind: output, shape index: {}]
  %s3 = sld [smem:[#allocation0]]
  $region22: #{_lambda_.1} parent=0
    _
  %s5 = ssub.s32 1, %s3
  %s6 = scalar_select 0, %s5, %s3
  $region1: #{_lambda_.1} parent=0
    #allocation2 [shape = 'u8[512]{0}', space=smem, size = 0x200, scoped, tag = 'input window, operand 0, single buffered']
    #allocation3 [shape = 's32[1]{0}', space=sflag, size = 0x4, scoped, tag = 'scoped memory for _lambda_.1']
    %7 = vsyncpa [#allocation3], 0
    // Predicated region
    $region2: #{_lambda_.1} parent=1 // pred_check
      _
    $region3: #{_lambda_.1} parent=1 // pred_check_branch
      %9 = sbr.rel (0) target = $region5
    $region4: #{_lambda_.1} parent=1 // pred_region
      %s11 = ssub.s32 16, 16
      %12 = vsyncadd [#allocation3], %s11
      %s14 = sshll.u32 %s0, 4
      %s15 = int_to_ptr.vmem [resolvable:$true] %s14
      %17 = dma.vmem_to_smem %s15, 16, [#allocation2], [#allocation3]
    $region5: #{_lambda_.1} parent=1 // pred_fallthru
      _
    // Predicated region
    $region6: #{_lambda_.1} parent=1 // pred_check
      _
    $region7: #{_lambda_.1} parent=1 // pred_check_branch
      %19 = sbr.rel (0) target = $region9
    $region8: #{_lambda_.1} parent=1 // pred_region
      _
    $region9: #{_lambda_.1} parent=1 // pred_fallthru
      _
    // Predicated region
    $region10: #{_lambda_.1} parent=1 // pred_check
      _
    $region11: #{_lambda_.1} parent=1 // pred_check_branch
      %21 = sbr.rel (0) target = $region13
    $region12: #{_lambda_.1} parent=1 // pred_region
      %22 = dma.done [#allocation3], 16
    $region13: #{_lambda_.1} parent=1 // pred_fallthru
      _
    %23 = sfence
    %s24 = sld [smem:[#allocation2]]
    %s25 = sld [smem:[#allocation2 + $0x1]]
    %s26 = sld [smem:[#allocation2 + $0x2]]
    %s27 = sld [smem:[#allocation2 + $0x3]]
    %s28 = sld [smem:[#allocation2 + $0x4]]
    %s29 = sld [smem:[#allocation2 + $0x5]]
    %s30 = sld [smem:[#allocation2 + $0x6]]
    %v31 = vld [vmem:[%s1] sm:$0xff]
    %v32 = vld [vmem:[%s1 + $0x8] sm:$0xff]
    %v33 = vstv %s24
    %v34 = vrcp.pop %v33
    %v35 = vmul.f32 %v31, %v34
    %v36 = vmul.f32 %v32, %v34
    %v37 = vmax.f32 %v35, 0.0
    %v38 = vmax.f32 %v36, 0.0
    %v39 = vadd.f32 %v37, 1e-20
    %v40 = vadd.f32 %v38, 1e-20
    %v41 = vlog2.pop %v39
    %v42 = vmul.f32 %v41, 0.6931472
    %v43 = vlog2.pop %v40
    %v44 = vmul.f32 %v43, 0.6931472
    %v45 = vsub.f32 0.0, %v42
    %v46 = vsub.f32 0.0, %v44
    %v47 = vstv %s25
    %v48 = vadd.f32 %v45, %v47
    %v49 = vadd.f32 %v46, %v47
    %v50 = vstv %s26
    %v51 = vrcp.pop %v50
    %v52 = vmul.f32 %v48, %v51
    %v53 = vmul.f32 %v49, %v51
    %v54 = vceil.f32 %v52
    %v55 = vceil.f32 %v53
    %v56 = vmax.f32 %v54, 0.0
    %v57 = vmax.f32 %v55, 0.0
    %v58 = vstv %s30
    %vm59 = vcmp.gt.f32.partialorder %v56, %v58
    %vm60 = vcmp.gt.f32.partialorder %v57, %v58
    %s61 = sadd.f32 %s30, 5.0
    %v62 = vstv %s61
    %v63 = vsel %vm59, %v62, %v56
    %v64 = vsel %vm60, %v62, %v57
    %s65 = ssub.f32 0.0, %s26
    %v66 = vstv %s65
    %v67 = vmul.f32 %v66, %v63
    %v68 = vmul.f32 %v66, %v64
    %v69 = vadd.f32 %v67, %v47
    %v70 = vadd.f32 %v68, %v47
    %v71 = vmul.f32 %v69, 1.442695
    %v72 = vpow.pop %v71
    %v73 = vmul.f32 %v70, 1.442695
    %v74 = vpow.pop %v73
    %v75 = vmul.f32 %v72, %v33
    %v76 = vmul.f32 %v74, %v33
    %v77 = vmin.f32 %v75, %v76
    %78 = vmin.xlane.f32.xlu0 %v77
    %v79 = vpop.xlane.xlu0 %78
    %v80 = vrot.slane %v79, 4
    %v81 = vmin.f32 %v79, %v80
    %v82 = vrot.slane %v81, 2
    %v83 = vmin.f32 %v81, %v82
    %v84 = vrot.slane %v83, 1
    %v85 = vmin.f32 %v83, %v84
    %s86 = vtos %v85
    %v87 = vstv %s86
    %vm88 = vcmp.eq.f32.partialorder %v75, %v87
    %vm89 = vcmp.eq.f32.partialorder %v76, %v87
    %v90 = vsel %vm88, 0.0, %v75
    %v91 = vsel %vm89, 0.0, %v76
    %v92 = vsub.f32 %v31, %v90
    %v93 = vsub.f32 %v32, %v91
    %v94 = vstv %s27
    %v95 = vrcp.pop %v94
    %v96 = vmul.f32 %v92, %v95
    %v97 = vmul.f32 %v93, %v95
    %v98 = vmax.f32 %v96, 0.0
    %v99 = vmax.f32 %v97, 0.0
    %v100 = vadd.f32 %v98, 1e-20
    %v101 = vadd.f32 %v99, 1e-20
    %v102 = vlog2.pop %v100
    %v103 = vmul.f32 %v102, 0.6931472
    %v104 = vlog2.pop %v101
    %v105 = vmul.f32 %v104, 0.6931472
    %v106 = vsub.f32 0.0, %v103
    %v107 = vsub.f32 0.0, %v105
    %v108 = vstv %s28
    %v109 = vadd.f32 %v106, %v108
    %v110 = vadd.f32 %v107, %v108
    %v111 = vstv %s29
    %v112 = vrcp.pop %v111
    %v113 = vmul.f32 %v109, %v112
    %v114 = vmul.f32 %v110, %v112
    %v115 = vceil.f32 %v113
    %v116 = vceil.f32 %v114
    %v117 = vmax.f32 %v115, 0.0
    %v118 = vmax.f32 %v116, 0.0
    %vm119 = vcmp.gt.f32.partialorder %v117, %v58
    %vm120 = vcmp.gt.f32.partialorder %v118, %v58
    %v121 = vsel %vm119, %v58, %v117
    %v122 = vsel %vm120, %v58, %v118
    %vm123 = vcmp.le.f32.partialorder %v121, %v63
    %vm124 = vcmp.le.f32.partialorder %v122, %v64
    %v125 = vsel %vm123, %v63, %v121
    %v126 = vsel %vm124, %v64, %v122
    %s127 = ssub.f32 0.0, %s29
    %v128 = vstv %s127
    %v129 = vmul.f32 %v128, %v125
    %v130 = vmul.f32 %v128, %v126
    %v131 = vadd.f32 %v129, %v108
    %v132 = vadd.f32 %v130, %v108
    %v133 = vmul.f32 %v131, 1.442695
    %v134 = vpow.pop %v133
    %v135 = vmul.f32 %v132, 1.442695
    %v136 = vpow.pop %v135
    %v137 = vmul.f32 %v134, %v94
    %v138 = vmul.f32 %v136, %v94
    %v139 = vmin.f32 %v137, %v138
    %140 = vmin.xlane.f32.xlu0 %v139
    %v141 = vpop.xlane.xlu0 %140
    %v142 = vrot.slane %v141, 4
    %v143 = vmin.f32 %v141, %v142
    %v144 = vrot.slane %v143, 2
    %v145 = vmin.f32 %v143, %v144
    %v146 = vrot.slane %v145, 1
    %v147 = vmin.f32 %v145, %v146
    %s148 = vtos %v147
    %v149 = vstv %s148
    %vm150 = vcmp.eq.f32.partialorder %v137, %v149
    %vm151 = vcmp.eq.f32.partialorder %v138, %v149
    %v152 = vsel %vm150, 0.0, %v137
    %v153 = vsel %vm151, 0.0, %v138
    %v154 = vadd.f32 %v90, %v152
    %v155 = vadd.f32 %v91, %v153
    %156 = vst [vmem:[%s2] sm:$0xff] %v154
    %157 = vst [vmem:[%s2 + $0x8] sm:$0xff] %v155
    // Predicated region
    $region14: #{_lambda_.1} parent=1 // pred_check
      _
    $region15: #{_lambda_.1} parent=1 // pred_check_branch
      %159 = sbr.rel (0) target = $region17
    $region16: #{_lambda_.1} parent=1 // pred_region
      _
    $region17: #{_lambda_.1} parent=1 // pred_fallthru
      _
    // Predicated region
    $region18: #{_lambda_.1} parent=1 // pred_check
      _
    $region19: #{_lambda_.1} parent=1 // pred_check_branch
      %161 = sbr.rel (0) target = $region21
    $region20: #{_lambda_.1} parent=1 // pred_region
      _
    $region21: #{_lambda_.1} parent=1 // pred_fallthru
      _
    %162 = vsyncpa [#allocation3], 1

</llo_original>
